<compile_context>
chip_gen: v7x
topology: tpu7x:2x2x1
jax: 0.10.0
libtpu: 0.0.40
codegen_flags: <defaults>
</compile_context>

<pallas_src>
import jax
import jax.numpy as jnp
from jax import lax
from jax.experimental import pallas as pl
from jax.experimental.pallas import tpu as pltpu

EPS = 1e-5


def _pick_samples_per_step(N, c_total, c_max_branch, hw, in_bytes, out_bytes,
                           target_step_bytes=4 << 20):
    """Choose how many samples to block per grid step and the VMEM limit.

    Generation-aware: big budget on 128-MiB-VMEM parts (v5e/v6e), conservative
    on 64-MiB parts (v7x) or when the hardware cannot be queried (interpret).
    The working-set estimate includes double-buffered inputs + output block and
    the f32 temporaries (x, x-mu, y) of the largest branch.
    """
    try:
        vmem_cap = int(pltpu.get_tpu_info().vmem_capacity_bytes)
    except Exception:
        vmem_cap = 0
    if vmem_cap >= 100 * 1024 * 1024:      # v5e / v6e: 128 MiB physical VMEM
        budget, vmem_limit = 40 << 20, 64 << 20
    else:                                  # v7x (64 MiB) or unknown: conservative
        budget, vmem_limit = 20 << 20, 32 << 20

    ws_per_sample = hw * (2 * c_total * (in_bytes + out_bytes)
                          + 3 * c_max_branch * 4)
    moved_per_sample = max(1, c_total * hw * (in_bytes + out_bytes))
    nb_target = max(1, -(-target_step_bytes // moved_per_sample))

    nb = 1
    for cand in range(1, N + 1):
        if N % cand:
            continue                        # keep Nb a divisor of N
        if cand > nb_target:
            break                           # payload target reached
        if cand * ws_per_sample <= budget:
            nb = cand
    return nb, vmem_limit


def _make_kernel(branch_channels, out_starts):
    num_branches = len(branch_channels)

    def kernel(*refs):
        x_refs = refs[:num_branches]           # each: (Nb, C_b, HW) VMEM block
        params_ref = refs[num_branches]        # (C_total, 2) f32 [:,0]=w [:,1]=b
        out_ref = refs[num_branches + 1]       # (Nb, C_total, HW) VMEM block

        params = params_ref[...]               # tiny, resident

        for b in range(num_branches):
            cb = branch_channels[b]
            c0 = out_starts[b]

            x = x_refs[b][...].astype(jnp.float32)          # (Nb, cb, HW)
            inv_hw = 1.0 / float(x.shape[-1])

            # Two-pass statistics in f32 (biased variance, matches InstanceNorm2d
            # training-mode normalization).
            mu = jnp.sum(x, axis=-1, keepdims=True) * inv_hw
            xc = x - mu
            var = jnp.sum(xc * xc, axis=-1, keepdims=True) * inv_hw
            inv_std = lax.rsqrt(var + EPS)                   # EUP slot

            # Static per-branch affine params (no dynamic sublane slices).
            w = params[c0:c0 + cb, 0:1][None, :, :]          # (1, cb, 1)
            bias = params[c0:c0 + cb, 1:2][None, :, :]       # (1, cb, 1)

            scale = inv_std * w                              # (Nb, cb, 1)
            y = xc * scale + bias                            # (Nb, cb, HW)

            # Static channel slice of the concatenated output block.
            out_ref[:, pl.ds(c0, cb), :] = y.astype(out_ref.dtype)

    return kernel


def ulyanov_join_block(inputs, weights, biases, *, samples_per_step=None):
    """Pallas implementation of UlyanovEtAl2016JoinBlock.forward (instance_norm=True).

    inputs  : list of arrays, each (N, C_i, H, W)  (NCHW)
    weights : list of arrays, each (C_i,)  -- InstanceNorm2d affine weight
    biases  : list of arrays, each (C_i,)  -- InstanceNorm2d affine bias
    returns : (N, sum(C_i), H, W)
    """
    num_branches = len(inputs)
    assert len(weights) == num_branches and len(biases) == num_branches

    N, _, H, W = inputs[0].shape
    HW = H * W
    branch_channels = tuple(int(x.shape[1]) for x in inputs)
    c_total = sum(branch_channels)
    out_starts = tuple(int(sum(branch_channels[:b])) for b in range(num_branches))
    dtype = inputs[0].dtype
    itemsize = int(jnp.dtype(dtype).itemsize)

    # Lane-dense layout: (N, C, H, W) -> (N, C, H*W); free row-major view.
    xs = [x.reshape(N, c, HW) for x, c in zip(inputs, branch_channels)]

    # Packed affine params: row = concatenated channel index, col 0 = weight,
    # col 1 = bias (f32).  Tiny, resident for the whole call.
    params = jnp.stack(
        [jnp.concatenate([w.reshape(-1).astype(jnp.float32) for w in weights]),
         jnp.concatenate([b.reshape(-1).astype(jnp.float32) for b in biases])],
        axis=1)                                                 # (C_total, 2)

    nb, vmem_limit = _pick_samples_per_step(
        N, c_total, max(branch_channels), HW, itemsize, itemsize)
    if samples_per_step is not None:
        nb = max(1, min(int(samples_per_step), N))
        while N % nb:                       # keep it a divisor of N
            nb -= 1

    grid = (N // nb,)

    in_specs = [pl.BlockSpec((nb, c, HW), lambda i: (i, 0, 0))
                for c in branch_channels]
    in_specs.append(pl.BlockSpec((c_total, 2), lambda i: (0, 0)))

    kernel = _make_kernel(branch_channels, out_starts)

    cost = pl.CostEstimate(
        flops=int(6 * N * c_total * HW),
        transcendentals=int(N * c_total),
        bytes_accessed=int(N * c_total * HW * 2 * itemsize + c_total * 8),
    )

    out = pl.pallas_call(
        kernel,
        out_shape=jax.ShapeDtypeStruct((N, c_total, HW), dtype),
        grid_spec=pltpu.PrefetchScalarGridSpec(
            num_scalar_prefetch=0,
            grid=grid,
            in_specs=in_specs,
            out_specs=pl.BlockSpec((nb, c_total, HW), lambda i: (i, 0, 0)),
        ),
        compiler_params=pltpu.CompilerParams(
            dimension_semantics=("parallel",),
            vmem_limit_bytes=vmem_limit,
        ),
        cost_estimate=cost,
    )(*xs, params)

    return out.reshape(N, c_total, H, W)


def _reference(inputs, weights, biases):
    outs = []
    for x, w, b in zip(inputs, weights, biases):
        x32 = x.astype(jnp.float32)
        mu = jnp.mean(x32, axis=(2, 3), keepdims=True)
        var = jnp.mean((x32 - mu) ** 2, axis=(2, 3), keepdims=True)
        y = (x32 - mu) / jnp.sqrt(var + EPS)
        y = y * w[None, :, None, None] + b[None, :, None, None]
        outs.append(y.astype(x.dtype))
    return jnp.concatenate(outs, axis=1)


def _make_case(key, branch_in_channels, N, H, W):
    keys = jax.random.split(key, 3 * len(branch_in_channels))
    inputs, weights, biases = [], [], []
    for i, c in enumerate(branch_in_channels):
        kx, kw, kb = keys[3 * i], keys[3 * i + 1], keys[3 * i + 2]
        inputs.append(jax.random.normal(kx, (N, c, H, W), dtype=jnp.float32))
        weights.append(1.0 + 0.1 * jax.random.normal(kw, (c,), dtype=jnp.float32))
        biases.append(0.1 * jax.random.normal(kb, (c,), dtype=jnp.float32))
    return inputs, weights, biases


if __name__ == "__main__":
    key = jax.random.PRNGKey(0)
    k1, k2 = jax.random.split(key)

    # Case 1: module-like config (two branches, branch_in_channels=[4, 3]).
    inputs, weights, biases = _make_case(k1, [4, 3], N=2, H=16, W=16)
    out = jax.block_until_ready(ulyanov_join_block(inputs, weights, biases))
    ref = _reference(inputs, weights, biases)
    assert out.shape == (2, 7, 16, 16)
    assert jnp.allclose(out, ref, atol=1e-4, rtol=1e-4)

    # Case 2: more channels and multiple grid steps (2 samples per step over
    # N=4), exercising the pipelined input/output path and unaligned branch
    # channel offsets in the concatenated output.
    inputs2, weights2, biases2 = _make_case(k2, [12, 5], N=4, H=16, W=16)
    out2 = jax.block_until_ready(
        ulyanov_join_block(inputs2, weights2, biases2, samples_per_step=2))
    ref2 = _reference(inputs2, weights2, biases2)
    assert out2.shape == (4, 17, 16, 16)
    assert jnp.allclose(out2, ref2, atol=1e-4, rtol=1e-4)

    print("KERNEL_OK")
</pallas_src>

<mosaic_0001>
module attributes {stable_mosaic.version = 11 : i64} {
  func.func @kernel(%arg0: i32, %arg1: memref<2x4x256xf32, #tpu.memory_space<vmem>>, %arg2: memref<2x3x256xf32, #tpu.memory_space<vmem>>, %arg3: memref<7x2xf32, #tpu.memory_space<vmem>>, %arg4: memref<2x7x256xf32, #tpu.memory_space<vmem>>) attributes {dimension_semantics = [#tpu.dimension_semantics<parallel>], iteration_bounds = array<i64: 1>, scalar_prefetch = 0 : i64, scratch_operands = 0 : i64, tpu.core_type = #tpu.core_type<tc>, window_params = [{transform_indices = @transform_0, window_bounds = array<i64: 2, 4, 256>}, {transform_indices = @transform_1, window_bounds = array<i64: 2, 3, 256>}, {pipeline_mode = #tpu.pipeline_mode<synchronous>, transform_indices = @transform_2, window_bounds = array<i64: 7, 2>}, {transform_indices = @transform_3, window_bounds = array<i64: 2, 7, 256>}]} {
    %c0 = arith.constant 0 : index
    %c0_0 = arith.constant 0 : index
    %0 = vector.load %arg3[%c0, %c0_0] : memref<7x2xf32, #tpu.memory_space<vmem>>, vector<7x2xf32>
    %c0_1 = arith.constant 0 : index
    %c0_2 = arith.constant 0 : index
    %c0_3 = arith.constant 0 : index
    %1 = vector.load %arg1[%c0_1, %c0_2, %c0_3] : memref<2x4x256xf32, #tpu.memory_space<vmem>>, vector<2x4x256xf32>
    %cst = arith.constant dense<0.000000e+00> : vector<2x4xf32>
    %2 = vector.multi_reduction <add>, %1, %cst [2] : vector<2x4x256xf32> to vector<2x4xf32>
    %3 = vector.shape_cast %2 : vector<2x4xf32> to vector<2x4x1xf32>
    %cst_4 = arith.constant 3.906250e-03 : f32
    %4 = vector.broadcast %cst_4 : f32 to vector<2x4x1xf32>
    %5 = arith.mulf %3, %4 : vector<2x4x1xf32>
    %6 = vector.broadcast %5 : vector<2x4x1xf32> to vector<2x4x256xf32>
    %7 = arith.subf %1, %6 : vector<2x4x256xf32>
    %8 = arith.mulf %7, %7 : vector<2x4x256xf32>
    %cst_5 = arith.constant dense<0.000000e+00> : vector<2x4xf32>
    %9 = vector.multi_reduction <add>, %8, %cst_5 [2] : vector<2x4x256xf32> to vector<2x4xf32>
    %10 = vector.shape_cast %9 : vector<2x4xf32> to vector<2x4x1xf32>
    %cst_6 = arith.constant 3.906250e-03 : f32
    %11 = vector.broadcast %cst_6 : f32 to vector<2x4x1xf32>
    %12 = arith.mulf %10, %11 : vector<2x4x1xf32>
    %cst_7 = arith.constant 9.99999974E-6 : f32
    %13 = vector.broadcast %cst_7 : f32 to vector<2x4x1xf32>
    %14 = arith.addf %12, %13 : vector<2x4x1xf32>
    %15 = math.rsqrt %14 : vector<2x4x1xf32>
    %16 = vector.extract_strided_slice %0 {offsets = [0, 0], sizes = [4, 1], strides = [1, 1]} : vector<7x2xf32> to vector<4x1xf32>
    %17 = vector.shape_cast %16 : vector<4x1xf32> to vector<1x4x1xf32>
    %18 = vector.extract_strided_slice %0 {offsets = [0, 1], sizes = [4, 1], strides = [1, 1]} : vector<7x2xf32> to vector<4x1xf32>
    %19 = vector.shape_cast %18 : vector<4x1xf32> to vector<1x4x1xf32>
    %20 = vector.broadcast %17 : vector<1x4x1xf32> to vector<2x4x1xf32>
    %21 = arith.mulf %15, %20 : vector<2x4x1xf32>
    %22 = vector.broadcast %21 : vector<2x4x1xf32> to vector<2x4x256xf32>
    %23 = arith.mulf %7, %22 : vector<2x4x256xf32>
    %24 = vector.broadcast %19 : vector<1x4x1xf32> to vector<2x4x256xf32>
    %25 = arith.addf %23, %24 : vector<2x4x256xf32>
    %c0_8 = arith.constant 0 : index
    %c0_9 = arith.constant 0 : index
    %c0_10 = arith.constant 0 : index
    %26 = vector.load %arg4[%c0_8, %c0_9, %c0_10] : memref<2x7x256xf32, #tpu.memory_space<vmem>>, vector<2x4x256xf32>
    tpu.vector_store %arg4[%c0_8, %c0_9, %c0_10], %25 {strides = array<i32>} : memref<2x7x256xf32, #tpu.memory_space<vmem>>, vector<2x4x256xf32>,
    %c0_11 = arith.constant 0 : index
    %c0_12 = arith.constant 0 : index
    %c0_13 = arith.constant 0 : index
    %27 = vector.load %arg2[%c0_11, %c0_12, %c0_13] : memref<2x3x256xf32, #tpu.memory_space<vmem>>, vector<2x3x256xf32>
    %cst_14 = arith.constant dense<0.000000e+00> : vector<2x3xf32>
    %28 = vector.multi_reduction <add>, %27, %cst_14 [2] : vector<2x3x256xf32> to vector<2x3xf32>
    %29 = vector.shape_cast %28 : vector<2x3xf32> to vector<2x3x1xf32>
    %cst_15 = arith.constant 3.906250e-03 : f32
    %30 = vector.broadcast %cst_15 : f32 to vector<2x3x1xf32>
    %31 = arith.mulf %29, %30 : vector<2x3x1xf32>
    %32 = vector.broadcast %31 : vector<2x3x1xf32> to vector<2x3x256xf32>
    %33 = arith.subf %27, %32 : vector<2x3x256xf32>
    %34 = arith.mulf %33, %33 : vector<2x3x256xf32>
    %cst_16 = arith.constant dense<0.000000e+00> : vector<2x3xf32>
    %35 = vector.multi_reduction <add>, %34, %cst_16 [2] : vector<2x3x256xf32> to vector<2x3xf32>
    %36 = vector.shape_cast %35 : vector<2x3xf32> to vector<2x3x1xf32>
    %cst_17 = arith.constant 3.906250e-03 : f32
    %37 = vector.broadcast %cst_17 : f32 to vector<2x3x1xf32>
    %38 = arith.mulf %36, %37 : vector<2x3x1xf32>
    %cst_18 = arith.constant 9.99999974E-6 : f32
    %39 = vector.broadcast %cst_18 : f32 to vector<2x3x1xf32>
    %40 = arith.addf %38, %39 : vector<2x3x1xf32>
    %41 = math.rsqrt %40 : vector<2x3x1xf32>
    %42 = vector.extract_strided_slice %0 {offsets = [4, 0], sizes = [3, 1], strides = [1, 1]} : vector<7x2xf32> to vector<3x1xf32>
    %43 = vector.shape_cast %42 : vector<3x1xf32> to vector<1x3x1xf32>
    %44 = vector.extract_strided_slice %0 {offsets = [4, 1], sizes = [3, 1], strides = [1, 1]} : vector<7x2xf32> to vector<3x1xf32>
    %45 = vector.shape_cast %44 : vector<3x1xf32> to vector<1x3x1xf32>
    %46 = vector.broadcast %43 : vector<1x3x1xf32> to vector<2x3x1xf32>
    %47 = arith.mulf %41, %46 : vector<2x3x1xf32>
    %48 = vector.broadcast %47 : vector<2x3x1xf32> to vector<2x3x256xf32>
    %49 = arith.mulf %33, %48 : vector<2x3x256xf32>
    %50 = vector.broadcast %45 : vector<1x3x1xf32> to vector<2x3x256xf32>
    %51 = arith.addf %49, %50 : vector<2x3x256xf32>
    %c0_19 = arith.constant 0 : index
    %c4 = arith.constant 4 : index
    %c0_20 = arith.constant 0 : index
    %52 = vector.load %arg4[%c0_19, %c4, %c0_20] : memref<2x7x256xf32, #tpu.memory_space<vmem>>, vector<2x3x256xf32>
    tpu.vector_store %arg4[%c0_19, %c4, %c0_20], %51 {strides = array<i32>} : memref<2x7x256xf32, #tpu.memory_space<vmem>>, vector<2x3x256xf32>,
    return
  }
  func.func @transform_0(%arg0: i32) -> (i32, i32, i32) {
    %c0_i32 = arith.constant 0 : i32
    %c0_i32_0 = arith.constant 0 : i32
    %c0_i32_1 = arith.constant 0 : i32
    return %arg0, %c0_i32, %c0_i32_0 : i32, i32, i32
  }
  func.func @transform_1(%arg0: i32) -> (i32, i32, i32) {
    %c0_i32 = arith.constant 0 : i32
    %c0_i32_0 = arith.constant 0 : i32
    %c0_i32_1 = arith.constant 0 : i32
    return %arg0, %c0_i32, %c0_i32_0 : i32, i32, i32
  }
  func.func @transform_2(%arg0: i32) -> (i32, i32) {
    %c0_i32 = arith.constant 0 : i32
    %c0_i32_0 = arith.constant 0 : i32
    %c0_i32_1 = arith.constant 0 : i32
    return %c0_i32, %c0_i32_0 : i32, i32
  }
  func.func @transform_3(%arg0: i32) -> (i32, i32, i32) {
    %c0_i32 = arith.constant 0 : i32
    %c0_i32_0 = arith.constant 0 : i32
    %c0_i32_1 = arith.constant 0 : i32
    return %arg0, %c0_i32, %c0_i32_0 : i32, i32, i32
  }
}

</mosaic_0001>

<llo_original>
// kernel: tpu_custom_call.1
$region0: #{tpu_custom_call.1}
  #allocation0 [shape = 'u32[]', space=smem, size = 0x4, offset = 0x4, fixed_abs, tag = 'smem constant byte address 0x4 - core index']
  #allocation1 [shape = 'u32[144,128]{1,0:T(1,128)}', space=vmem, size = 0x12000, scoped, tag = 'internal scratch']
  %s0 = inlined_call_operand.vmem [shape: f32[2,4,256], index: 0, kind: input, shape index: {}]
  %s1 = inlined_call_operand.vmem [shape: f32[2,3,256], index: 1, kind: input, shape index: {}]
  %s2 = inlined_call_operand.vmem [shape: f32[7,2], index: 2, kind: input, shape index: {}]
  %s3 = inlined_call_operand.vmem [shape: f32[2,7,256], index: 3, kind: output, shape index: {}]
  %s4 = sld [smem:[#allocation0]]
  $region22: #{tpu_custom_call.1} parent=0
    _
  %s6 = ssub.s32 1, %s4
  %s7 = scalar_select 0, %s6, %s4
  // Predicated region
  $region2: #{tpu_custom_call.1} parent=0 // pred_check
    _
  $region3: #{tpu_custom_call.1} parent=0 // pred_check_branch
    %9 = sbr.rel (0) target = $region5
  $region4: #{tpu_custom_call.1} parent=0 // pred_region
    _
  $region5: #{tpu_custom_call.1} parent=0 // pred_fallthru
    _
  // Predicated region
  $region6: #{tpu_custom_call.1} parent=0 // pred_check
    _
  $region7: #{tpu_custom_call.1} parent=0 // pred_check_branch
    %11 = sbr.rel (0) target = $region9
  $region8: #{tpu_custom_call.1} parent=0 // pred_region
    _
  $region9: #{tpu_custom_call.1} parent=0 // pred_fallthru
    _
  // Predicated region
  $region10: #{tpu_custom_call.1} parent=0 // pred_check
    _
  $region11: #{tpu_custom_call.1} parent=0 // pred_check_branch
    %13 = sbr.rel (0) target = $region13
  $region12: #{tpu_custom_call.1} parent=0 // pred_region
    _
  $region13: #{tpu_custom_call.1} parent=0 // pred_fallthru
    _
  %v14 = vld [vmem:[%s2] sm:$0x7f]
  %v15 = vld [vmem:[%s0] sm:$0xff]
  %v16 = vld [vmem:[%s0 + $0x8] sm:$0xff]
  %v19 = vcombine.high %v15, %v15
  %v20 = vcombine.high %v16, %v16
  %vm23 = vcmask 1043456
  %v24 = vsel %vm23, %v15, 0.0
  %v25 = vsel %vm23, %v19, 0.0
  %v26 = vadd.f32 %v24, %v25
  %27 = vadd.xlane.f32.xlu0 %v26
  %v28 = vpop.xlane.xlu0 %27
  %v29 = vsel %vm23, %v16, 0.0
  %v30 = vsel %vm23, %v20, 0.0
  %v31 = vadd.f32 %v29, %v30
  %32 = vadd.xlane.f32.xlu0 %v31
  %v33 = vpop.xlane.xlu0 %32
  %v34 = vmul.f32 %v28, 0.00390625
  %v35 = vmul.f32 %v33, 0.00390625
  %v39 = vunpack.c.l.s4 839922192
  %v40 = vunpack.c.0.s8 %v39
  %v41 = vlaneseq
  %v42 = vshrl.u32 %v41, 7
  %v43 = vsub.s32 %v40, %v42
  %v44 = vrot.slane %v34, %v43
  %v46 = vunpack.c.l.s4 839922192
  %v47 = vunpack.c.0.s8 %v46
  %v48 = vlaneseq
  %v49 = vshrl.u32 %v48, 7
  %v50 = vsub.s32 %v47, %v49
  %v51 = vrot.slane %v35, %v50
  %v54 = vsub.f32 %v15, %v44
  %v55 = vsub.f32 %v16, %v51
  %v56 = vmul.f32 %v54, %v54
  %v57 = vmul.f32 %v55, %v55
  %v60 = vcombine.high %v56, %v56
  %v61 = vcombine.high %v57, %v57
  %v64 = vsel %vm23, %v56, 0.0
  %v65 = vsel %vm23, %v60, 0.0
  %v66 = vadd.f32 %v64, %v65
  %67 = vadd.xlane.f32.xlu0 %v66
  %v68 = vpop.xlane.xlu0 %67
  %v69 = vsel %vm23, %v57, 0.0
  %v70 = vsel %vm23, %v61, 0.0
  %v71 = vadd.f32 %v69, %v70
  %72 = vadd.xlane.f32.xlu0 %v71
  %v73 = vpop.xlane.xlu0 %72
  %v74 = vmul.f32 %v68, 0.00390625
  %v75 = vmul.f32 %v73, 0.00390625
  %v76 = vadd.f32 %v74, 1e-05
  %v77 = vadd.f32 %v75, 1e-05
  %v78 = vrsqrt.pop %v76
  %v79 = vrsqrt.pop %v77
  %v80 = vmul.f32 %v78, %v14
  %v81 = vmul.f32 %v79, %v14
  %83 = vset.pattern.permute.xlu0 0
  %84 = vperm.xlu0 %83, %v80
  %v85 = vpop.permute.xlu0 %84
  %87 = vset.pattern.permute.xlu0 0
  %88 = vperm.xlu0 %87, %v81
  %v89 = vpop.permute.xlu0 %88
  %v91 = vunpack.c.l.s4 839922192
  %v92 = vunpack.c.0.s8 %v91
  %v93 = vlaneseq
  %v94 = vshrl.u32 %v93, 7
  %v95 = vsub.s32 %v92, %v94
  %v96 = vrot.slane %v85, %v95
  %v98 = vunpack.c.l.s4 839922192
  %v99 = vunpack.c.0.s8 %v98
  %v100 = vlaneseq
  %v101 = vshrl.u32 %v100, 7
  %v102 = vsub.s32 %v99, %v101
  %v103 = vrot.slane %v89, %v102
  %v106 = vmul.f32 %v54, %v96
  %v107 = vmul.f32 %v55, %v103
  %109 = vset.pattern.permute.xlu0 1
  %110 = vperm.xlu0 %109, %v14
  %v111 = vpop.permute.xlu0 %110
  %v113 = vunpack.c.l.s4 839922192
  %v114 = vunpack.c.0.s8 %v113
  %v115 = vlaneseq
  %v116 = vshrl.u32 %v115, 7
  %v117 = vsub.s32 %v114, %v116
  %v118 = vrot.slane %v111, %v117
  %v120 = vadd.f32 %v106, %v118
  %v121 = vadd.f32 %v107, %v118
  %v124 = vcombine.high %v120, %v120
  %v125 = vcombine.high %v121, %v121
  %128 = vst [vmem:[%s3] sm:$0xf] %v120
  %129 = vst [vmem:[%s3 + $0x8] sm:$0xf] %v124
  %130 = vst [vmem:[%s3 + $0x10] sm:$0xf] %v121
  %131 = vst [vmem:[%s3 + $0x18] sm:$0xf] %v125
  %v132 = vld [vmem:[%s1] sm:$0x77]
  %v133 = vld [vmem:[%s1 + $0x8] sm:$0x77]
  %v136 = vcombine.high %v132, %v132
  %v137 = vcombine.high %v133, %v133
  %vm140 = vcmask 1042432
  %v141 = vsel %vm140, %v132, 0.0
  %v142 = vsel %vm140, %v136, 0.0
  %v143 = vadd.f32 %v141, %v142
  %144 = vadd.xlane.f32.xlu0 %v143
  %v145 = vpop.xlane.xlu0 %144
  %v146 = vsel %vm140, %v133, 0.0
  %v147 = vsel %vm140, %v137, 0.0
  %v148 = vadd.f32 %v146, %v147
  %149 = vadd.xlane.f32.xlu0 %v148
  %v150 = vpop.xlane.xlu0 %149
  %v151 = vmul.f32 %v145, 0.00390625
  %v152 = vmul.f32 %v150, 0.00390625
  %v156 = vunpack.c.l.s4 839922192
  %v157 = vunpack.c.0.s8 %v156
  %v158 = vlaneseq
  %v159 = vshrl.u32 %v158, 7
  %v160 = vsub.s32 %v157, %v159
  %v161 = vrot.slane %v151, %v160
  %v163 = vunpack.c.l.s4 839922192
  %v164 = vunpack.c.0.s8 %v163
  %v165 = vlaneseq
  %v166 = vshrl.u32 %v165, 7
  %v167 = vsub.s32 %v164, %v166
  %v168 = vrot.slane %v152, %v167
  %v171 = vsub.f32 %v132, %v161
  %v172 = vsub.f32 %v133, %v168
  %v173 = vmul.f32 %v171, %v171
  %v174 = vmul.f32 %v172, %v172
  %v177 = vcombine.high %v173, %v173
  %v178 = vcombine.high %v174, %v174
  %v181 = vsel %vm140, %v173, 0.0
  %v182 = vsel %vm140, %v177, 0.0
  %v183 = vadd.f32 %v181, %v182
  %184 = vadd.xlane.f32.xlu0 %v183
  %v185 = vpop.xlane.xlu0 %184
  %v186 = vsel %vm140, %v174, 0.0
  %v187 = vsel %vm140, %v178, 0.0
  %v188 = vadd.f32 %v186, %v187
  %189 = vadd.xlane.f32.xlu0 %v188
  %v190 = vpop.xlane.xlu0 %189
  %v191 = vmul.f32 %v185, 0.00390625
  %v192 = vmul.f32 %v190, 0.00390625
  %v193 = vadd.f32 %v191, 1e-05
  %v194 = vadd.f32 %v192, 1e-05
  %v195 = vrsqrt.pop %v193
  %v196 = vrsqrt.pop %v194
  %v197 = vrot.slane %v14, 4
  %v199 = vmul.f32 %v195, %v197
  %v200 = vmul.f32 %v196, %v197
  %202 = vset.pattern.permute.xlu0 0
  %203 = vperm.xlu0 %202, %v199
  %v204 = vpop.permute.xlu0 %203
  %206 = vset.pattern.permute.xlu0 0
  %207 = vperm.xlu0 %206, %v200
  %v208 = vpop.permute.xlu0 %207
  %v210 = vunpack.c.l.s4 839922192
  %v211 = vunpack.c.0.s8 %v210
  %v212 = vlaneseq
  %v213 = vshrl.u32 %v212, 7
  %v214 = vsub.s32 %v211, %v213
  %v215 = vrot.slane %v204, %v214
  %v217 = vunpack.c.l.s4 839922192
  %v218 = vunpack.c.0.s8 %v217
  %v219 = vlaneseq
  %v220 = vshrl.u32 %v219, 7
  %v221 = vsub.s32 %v218, %v220
  %v222 = vrot.slane %v208, %v221
  %v225 = vmul.f32 %v171, %v215
  %v226 = vmul.f32 %v172, %v222
  %v228 = vunpack.c.l.s4 1985246804
  %v229 = vunpack.c.0.s8 %v228
  %v230 = vlaneseq
  %v231 = vshrl.u32 %v230, 7
  %v232 = vsub.s32 %v229, %v231
  %v233 = vrot.slane %v111, %v232
  %v235 = vadd.f32 %v225, %v233
  %v236 = vadd.f32 %v226, %v233
  %v239 = vcombine.low %v235, %v235
  %v240 = vcombine.low %v236, %v236
  %243 = vst [vmem:[%s3] sm:$0x70] %v239
  %244 = vst [vmem:[%s3 + $0x8] sm:$0x70] %v235
  %245 = vst [vmem:[%s3 + $0x10] sm:$0x70] %v240
  %246 = vst [vmem:[%s3 + $0x18] sm:$0x70] %v236
  // Predicated region
  $region14: #{tpu_custom_call.1} parent=0 // pred_check
    _
  $region15: #{tpu_custom_call.1} parent=0 // pred_check_branch
    %248 = sbr.rel (0) target = $region17
  $region16: #{tpu_custom_call.1} parent=0 // pred_region
    _
  $region17: #{tpu_custom_call.1} parent=0 // pred_fallthru
    _
  // Predicated region
  $region18: #{tpu_custom_call.1} parent=0 // pred_check
    _
  $region19: #{tpu_custom_call.1} parent=0 // pred_check_branch
    %250 = sbr.rel (0) target = $region21
  $region20: #{tpu_custom_call.1} parent=0 // pred_region
    _
  $region21: #{tpu_custom_call.1} parent=0 // pred_fallthru
    _

</llo_original>
